<compile_context>
chip_gen: v7x
topology: tpu7x:2x2x1
jax: 0.10.0
libtpu: 0.0.40
codegen_flags: <defaults>
</compile_context>

<pallas_src>
import jax
import jax.numpy as jnp
from jax.experimental import pallas as pl
from jax.experimental.pallas import tpu as pltpu


# ----------------------------------------------------------------------------
# Kernels
# ----------------------------------------------------------------------------
def _scse_fused_kernel(x_ref, wsq_ref, w1_ref, b1_ref, w2_ref, b2_ref, o_ref):
    """Fully fused per-batch SCse.

    Blocks: x_ref (1, C, HW); wsq_ref (C, 1); w1_ref (C, Cr); b1_ref (1, Cr);
            w2_ref (C, Cr); b2_ref (C, 1); o_ref (1, C, HW).
    """
    x = x_ref[0].astype(jnp.float32)                       # (C, HW)

    # ---- channel gate (GAB): global avg-pool + 2-layer MLP + sigmoid ----
    m = jnp.mean(x, axis=1, keepdims=True)                 # (C, 1)   lane reduce
    # z1[j] = relu(sum_c w1[c, j] * m[c] + b1[j])          -> (1, Cr) sublane reduce
    z1 = jnp.maximum(
        jnp.sum(w1_ref[...] * m, axis=0, keepdims=True) + b1_ref[...], 0.0)
    # z2[c] = sigmoid(sum_j w2[c, j] * z1[j] + b2[c])      -> (C, 1)  lane reduce
    z2 = jax.nn.sigmoid(
        jnp.sum(w2_ref[...] * z1, axis=1, keepdims=True) + b2_ref[...])

    # ---- spatial gate: sigmoid(sum_c wsq[c] * x[c, hw]) -> (1, HW) ----
    s = jax.nn.sigmoid(jnp.sum(x * wsq_ref[...], axis=0, keepdims=True))

    # ---- fused output: x * (s + z2), single multiply per element ----
    o_ref[0] = (x * (s + z2)).astype(o_ref.dtype)


def _scse_tiled_kernel(x_ref, wsq_ref, z2_ref, o_ref):
    """Spatial gate + fused multiply; channel gate z2 precomputed per batch.

    Blocks: x_ref (1, C, T); wsq_ref (C, 1); z2_ref (1, C, 1); o_ref (1, C, T).
    Reduction is over C (sublanes) only -> each output lane depends only on
    its own input lane, so padded lanes in a partial last block stay isolated
    and are masked on writeback.
    """
    x = x_ref[0].astype(jnp.float32)                        # (C, T)
    s = jax.nn.sigmoid(jnp.sum(x * wsq_ref[...], axis=0, keepdims=True))
    o_ref[0] = (x * (s + z2_ref[0])).astype(o_ref.dtype)


# ----------------------------------------------------------------------------
# Sizing helpers (generation- and dtype-aware)
# ----------------------------------------------------------------------------
def _vmem_budgets():
    """(vmem_limit_bytes, per-tile working-set budget) for this TPU generation."""
    try:
        cap = getattr(pltpu.get_tpu_info(), "vmem_capacity_bytes", None)
    except Exception:  # not on TPU / API unavailable -> be conservative
        cap = None
    if cap is None:
        cap = 64 * 1024 * 1024                      # v7x-safe fallback
    # v7x (64 MiB)  -> limit 48 MiB, tile budget ~19 MiB
    # v5e/v6e (128) -> limit 96 MiB, tile budget 32 MiB
    vmem_limit = min(int(cap * 0.75), 96 * 1024 * 1024)
    tile_budget = min(int(vmem_limit * 0.40), 32 * 1024 * 1024)
    return vmem_limit, tile_budget


def _pick_tile_hw(HW, per_col_bytes, tile_budget_bytes):
    """Largest lane-dense (multiple-of-128) HW tile fitting the budget.

    Used with a cdiv grid + padded last block, so it need not divide HW.
    """
    max_tile = (tile_budget_bytes // max(per_col_bytes, 1)) // 128 * 128
    max_tile = max(128, max_tile)
    if max_tile >= HW:
        return HW                                   # full extent (always legal)
    return max_tile


# ----------------------------------------------------------------------------
# Wrapper
# ----------------------------------------------------------------------------
def scse_pallas(x_nchw, wsq, w1, b1, w2, b2, *, force_tiled=False, tile_hw=None):
    """SCse forward.

    Parameter layout (1x1 convs stored as matmul weights):
      wsq: (C, 1)   <-> squeeze.weight (1, C, 1, 1), no bias
      w1 : (C, Cr)  <-> conv1.weight (Cr, C, 1, 1) transposed; b1: (Cr,)
      w2 : (Cr, C)  <-> conv2.weight (C, Cr, 1, 1) transposed; b2: (C,)
    """
    N, C, H, W = x_nchw.shape
    HW = H * W
    Cr = w1.shape[-1]
    x = x_nchw.reshape(N, C, HW)                    # free reshape, no transpose
    itemsize = jnp.dtype(x.dtype).itemsize

    vmem_limit, tile_budget = _vmem_budgets()
    # Working-set model per HW column: 2 in + 2 out pipeline buffers (input
    # dtype) + ~2 full-tile f32 temporaries (upcast, pre-reduce product).
    per_col_bytes = C * (4 * itemsize + 2 * 4)

    compiler_params = pltpu.CompilerParams(
        dimension_semantics=("parallel",),
        vmem_limit_bytes=vmem_limit,
    )

    wsq_f = wsq.astype(jnp.float32).reshape(C, 1)

    # ---------------- fused single-pass path ----------------
    if (not force_tiled) and (HW * per_col_bytes <= tile_budget):
        w1_f = w1.astype(jnp.float32).reshape(C, Cr)          # (C, Cr)
        b1_f = b1.astype(jnp.float32).reshape(1, Cr)
        w2_f = w2.astype(jnp.float32).reshape(Cr, C).T        # (C, Cr)
        b2_f = b2.astype(jnp.float32).reshape(C, 1)

        out = pl.pallas_call(
            _scse_fused_kernel,
            out_shape=jax.ShapeDtypeStruct((N, C, HW), x.dtype),
            grid=(N,),
            in_specs=[
                pl.BlockSpec((1, C, HW), lambda n: (n, 0, 0)),   # x slab
                pl.BlockSpec((C, 1), lambda n: (0, 0)),          # squeeze w
                pl.BlockSpec((C, Cr), lambda n: (0, 0)),         # conv1 w
                pl.BlockSpec((1, Cr), lambda n: (0, 0)),         # conv1 b
                pl.BlockSpec((C, Cr), lambda n: (0, 0)),         # conv2 w
                pl.BlockSpec((C, 1), lambda n: (0, 0)),          # conv2 b
            ],
            out_specs=pl.BlockSpec((1, C, HW), lambda n: (n, 0, 0)),
            compiler_params=compiler_params,
        )(x, wsq_f, w1_f, b1_f, w2_f, b2_f)
        return out.reshape(N, C, H, W)

    # ---------------- tiled fallback (slab too big for VMEM) ----------------
    # Channel gate hoisted to XLA: O(N*C) result, but costs one extra HBM
    # read of x (unavoidable once the slab cannot stay resident).
    xf = x.astype(jnp.float32)
    m = jnp.mean(xf, axis=2)                                   # (N, C)
    z1 = jnp.maximum(m @ w1.astype(jnp.float32) + b1.astype(jnp.float32), 0.0)
    z2 = jax.nn.sigmoid(z1 @ w2.astype(jnp.float32) + b2.astype(jnp.float32))
    z2 = z2.reshape(N, C, 1)

    if tile_hw is None:
        tile_hw = _pick_tile_hw(HW, per_col_bytes, tile_budget)
    num_t = pl.cdiv(HW, tile_hw)                   # cdiv grid, padded last block
    grid = (N * num_t,)                            # flat parallel axis: 2-TC balance

    # NOTE: pipeline_mode=pl.Buffered(3) on the x spec would help hide DMA
    # latency if tile_hw ever collapses to ~128 lanes; left at the default
    # double-buffering since large tiles are picked whenever VMEM allows.
    out = pl.pallas_call(
        _scse_tiled_kernel,
        out_shape=jax.ShapeDtypeStruct((N, C, HW), x.dtype),
        grid=grid,
        in_specs=[
            pl.BlockSpec((1, C, tile_hw), lambda i: (i // num_t, 0, i % num_t)),
            pl.BlockSpec((C, 1), lambda i: (0, 0)),
            pl.BlockSpec((1, C, 1), lambda i: (i // num_t, 0, 0)),
        ],
        out_specs=pl.BlockSpec((1, C, tile_hw), lambda i: (i // num_t, 0, i % num_t)),
        compiler_params=compiler_params,
    )(x, wsq_f, z2)
    return out.reshape(N, C, H, W)


# ----------------------------------------------------------------------------
# Pure-JAX reference (mirrors the PyTorch module, NCHW)
# ----------------------------------------------------------------------------
def scse_reference(x_nchw, wsq, w1, b1, w2, b2):
    # spatial attention
    s = jax.nn.sigmoid(jnp.einsum("nchw,c->nhw", x_nchw, wsq[:, 0]))[:, None]
    satt = x_nchw * s
    # channel attention
    m = jnp.mean(x_nchw, axis=(2, 3))                  # (N, C)
    z1 = jnp.maximum(m @ w1 + b1, 0.0)                 # (N, C//r)
    z2 = jax.nn.sigmoid(z1 @ w2 + b2)                  # (N, C)
    catt = x_nchw * z2[:, :, None, None]
    return satt + catt


if __name__ == "__main__":
    key = jax.random.PRNGKey(0)
    N, C, H, W = 2, 8, 16, 16
    reduction = 4
    Cr = C // reduction

    k_x, k_wsq, k_w1, k_b1, k_w2, k_b2, k_x2 = jax.random.split(key, 7)
    x = jax.random.normal(k_x, (N, C, H, W), jnp.float32)

    wsq = jax.random.normal(k_wsq, (C, 1), jnp.float32) * 0.3
    w1 = jax.random.normal(k_w1, (C, Cr), jnp.float32) * 0.3
    b1 = jax.random.normal(k_b1, (Cr,), jnp.float32) * 0.1
    w2 = jax.random.normal(k_w2, (Cr, C), jnp.float32) * 0.3
    b2 = jax.random.normal(k_b2, (C,), jnp.float32) * 0.1

    # 1) Fused single-pass path (per-batch slab resident in VMEM).
    out = jax.block_until_ready(scse_pallas(x, wsq, w1, b1, w2, b2))
    ref = scse_reference(x, wsq, w1, b1, w2, b2)
    assert out.shape == (N, C, H, W)
    assert jnp.allclose(out, ref, atol=1e-4, rtol=1e-4)

    # 2) Tiled fallback path, HW not a multiple of 128 -> exercises the cdiv
    #    grid with a masked partial last block and the flattened parallel axis.
    H2, W2 = 16, 18  # HW = 288 = 2*128 + 32
    x2 = jax.random.normal(k_x2, (N, C, H2, W2), jnp.float32)
    out2 = jax.block_until_ready(
        scse_pallas(x2, wsq, w1, b1, w2, b2, force_tiled=True, tile_hw=128))
    ref2 = scse_reference(x2, wsq, w1, b1, w2, b2)
    assert out2.shape == (N, C, H2, W2)
    assert jnp.allclose(out2, ref2, atol=1e-4, rtol=1e-4)

    print("KERNEL_OK")
</pallas_src>

<mosaic_0001>
module attributes {stable_mosaic.version = 11 : i64} {
  func.func @_scse_fused_kernel(%arg0: i32, %arg1: memref<1x8x256xf32, #tpu.memory_space<vmem>>, %arg2: memref<8x1xf32, #tpu.memory_space<vmem>>, %arg3: memref<8x2xf32, #tpu.memory_space<vmem>>, %arg4: memref<1x2xf32, #tpu.memory_space<vmem>>, %arg5: memref<8x2xf32, #tpu.memory_space<vmem>>, %arg6: memref<8x1xf32, #tpu.memory_space<vmem>>, %arg7: memref<1x8x256xf32, #tpu.memory_space<vmem>>) attributes {dimension_semantics = [#tpu.dimension_semantics<parallel>], iteration_bounds = array<i64: 2>, scalar_prefetch = 0 : i64, scratch_operands = 0 : i64, tpu.core_type = #tpu.core_type<tc>, window_params = [{transform_indices = @transform_0, window_bounds = array<i64: 1, 8, 256>}, {pipeline_mode = #tpu.pipeline_mode<synchronous>, transform_indices = @transform_1, window_bounds = array<i64: 8, 1>}, {pipeline_mode = #tpu.pipeline_mode<synchronous>, transform_indices = @transform_2, window_bounds = array<i64: 8, 2>}, {pipeline_mode = #tpu.pipeline_mode<synchronous>, transform_indices = @transform_3, window_bounds = array<i64: 1, 2>}, {pipeline_mode = #tpu.pipeline_mode<synchronous>, transform_indices = @transform_4, window_bounds = array<i64: 8, 2>}, {pipeline_mode = #tpu.pipeline_mode<synchronous>, transform_indices = @transform_5, window_bounds = array<i64: 8, 1>}, {transform_indices = @transform_6, window_bounds = array<i64: 1, 8, 256>}]} {
    %c0 = arith.constant 0 : index
    %c0_0 = arith.constant 0 : index
    %c0_1 = arith.constant 0 : index
    %0 = vector.load %arg1[%c0, %c0_0, %c0_1] : memref<1x8x256xf32, #tpu.memory_space<vmem>>, vector<1x8x256xf32>
    %1 = vector.shape_cast %0 : vector<1x8x256xf32> to vector<8x256xf32>
    %cst = arith.constant dense<0.000000e+00> : vector<8xf32>
    %2 = vector.multi_reduction <add>, %1, %cst [1] : vector<8x256xf32> to vector<8xf32>
    %3 = vector.shape_cast %2 : vector<8xf32> to vector<8x1xf32>
    %cst_2 = arith.constant 2.560000e+02 : f32
    %4 = vector.broadcast %cst_2 : f32 to vector<8x1xf32>
    %5 = arith.divf %3, %4 : vector<8x1xf32>
    %c0_3 = arith.constant 0 : index
    %c0_4 = arith.constant 0 : index
    %6 = vector.load %arg3[%c0_3, %c0_4] : memref<8x2xf32, #tpu.memory_space<vmem>>, vector<8x2xf32>
    %7 = vector.broadcast %5 : vector<8x1xf32> to vector<8x2xf32>
    %8 = arith.mulf %6, %7 : vector<8x2xf32>
    %cst_5 = arith.constant dense<0.000000e+00> : vector<2xf32>
    %9 = vector.multi_reduction <add>, %8, %cst_5 [0] : vector<8x2xf32> to vector<2xf32>
    %10 = vector.shape_cast %9 : vector<2xf32> to vector<1x2xf32>
    %c0_6 = arith.constant 0 : index
    %c0_7 = arith.constant 0 : index
    %11 = vector.load %arg4[%c0_6, %c0_7] : memref<1x2xf32, #tpu.memory_space<vmem>>, vector<1x2xf32>
    %12 = arith.addf %10, %11 : vector<1x2xf32>
    %cst_8 = arith.constant 0.000000e+00 : f32
    %13 = vector.broadcast %cst_8 : f32 to vector<1x2xf32>
    %14 = arith.maximumf %12, %13 : vector<1x2xf32>
    %c0_9 = arith.constant 0 : index
    %c0_10 = arith.constant 0 : index
    %15 = vector.load %arg5[%c0_9, %c0_10] : memref<8x2xf32, #tpu.memory_space<vmem>>, vector<8x2xf32>
    %16 = vector.broadcast %14 : vector<1x2xf32> to vector<8x2xf32>
    %17 = arith.mulf %15, %16 : vector<8x2xf32>
    %cst_11 = arith.constant dense<0.000000e+00> : vector<8xf32>
    %18 = vector.multi_reduction <add>, %17, %cst_11 [1] : vector<8x2xf32> to vector<8xf32>
    %19 = vector.shape_cast %18 : vector<8xf32> to vector<8x1xf32>
    %c0_12 = arith.constant 0 : index
    %c0_13 = arith.constant 0 : index
    %20 = vector.load %arg6[%c0_12, %c0_13] : memref<8x1xf32, #tpu.memory_space<vmem>>, vector<8x1xf32>
    %21 = arith.addf %19, %20 : vector<8x1xf32>
    %22 = arith.negf %21 : vector<8x1xf32>
    %23 = math.exp %22 : vector<8x1xf32>
    %cst_14 = arith.constant 1.000000e+00 : f32
    %24 = vector.broadcast %cst_14 : f32 to vector<8x1xf32>
    %25 = arith.addf %24, %23 : vector<8x1xf32>
    %26 = arith.divf %24, %25 : vector<8x1xf32>
    %c0_15 = arith.constant 0 : index
    %c0_16 = arith.constant 0 : index
    %27 = vector.load %arg2[%c0_15, %c0_16] : memref<8x1xf32, #tpu.memory_space<vmem>>, vector<8x1xf32>
    %28 = vector.broadcast %27 : vector<8x1xf32> to vector<8x256xf32>
    %29 = arith.mulf %1, %28 : vector<8x256xf32>
    %cst_17 = arith.constant dense<0.000000e+00> : vector<256xf32>
    %30 = vector.multi_reduction <add>, %29, %cst_17 [0] : vector<8x256xf32> to vector<256xf32>
    %31 = vector.shape_cast %30 : vector<256xf32> to vector<1x256xf32>
    %32 = arith.negf %31 : vector<1x256xf32>
    %33 = math.exp %32 : vector<1x256xf32>
    %cst_18 = arith.constant 1.000000e+00 : f32
    %34 = vector.broadcast %cst_18 : f32 to vector<1x256xf32>
    %35 = arith.addf %34, %33 : vector<1x256xf32>
    %36 = arith.divf %34, %35 : vector<1x256xf32>
    %37 = vector.broadcast %36 : vector<1x256xf32> to vector<8x256xf32>
    %38 = vector.broadcast %26 : vector<8x1xf32> to vector<8x256xf32>
    %39 = arith.addf %37, %38 : vector<8x256xf32>
    %40 = arith.mulf %1, %39 : vector<8x256xf32>
    %c0_19 = arith.constant 0 : index
    %c0_20 = arith.constant 0 : index
    %c0_21 = arith.constant 0 : index
    %41 = vector.load %arg7[%c0_19, %c0_20, %c0_21] : memref<1x8x256xf32, #tpu.memory_space<vmem>>, vector<1x8x256xf32>
    %42 = vector.shape_cast %41 : vector<1x8x256xf32> to vector<8x256xf32>
    %43 = vector.shape_cast %40 : vector<8x256xf32> to vector<1x8x256xf32>
    tpu.vector_store %arg7[%c0_19, %c0_20, %c0_21], %43 {strides = array<i32>} : memref<1x8x256xf32, #tpu.memory_space<vmem>>, vector<1x8x256xf32>,
    return
  }
  func.func @transform_0(%arg0: i32) -> (i32, i32, i32) {
    %c0_i32 = arith.constant 0 : i32
    %c0_i32_0 = arith.constant 0 : i32
    %c0_i32_1 = arith.constant 0 : i32
    return %arg0, %c0_i32, %c0_i32_0 : i32, i32, i32
  }
  func.func @transform_1(%arg0: i32) -> (i32, i32) {
    %c0_i32 = arith.constant 0 : i32
    %c0_i32_0 = arith.constant 0 : i32
    %c0_i32_1 = arith.constant 0 : i32
    return %c0_i32, %c0_i32_0 : i32, i32
  }
  func.func @transform_2(%arg0: i32) -> (i32, i32) {
    %c0_i32 = arith.constant 0 : i32
    %c0_i32_0 = arith.constant 0 : i32
    %c0_i32_1 = arith.constant 0 : i32
    return %c0_i32, %c0_i32_0 : i32, i32
  }
  func.func @transform_3(%arg0: i32) -> (i32, i32) {
    %c0_i32 = arith.constant 0 : i32
    %c0_i32_0 = arith.constant 0 : i32
    %c0_i32_1 = arith.constant 0 : i32
    return %c0_i32, %c0_i32_0 : i32, i32
  }
  func.func @transform_4(%arg0: i32) -> (i32, i32) {
    %c0_i32 = arith.constant 0 : i32
    %c0_i32_0 = arith.constant 0 : i32
    %c0_i32_1 = arith.constant 0 : i32
    return %c0_i32, %c0_i32_0 : i32, i32
  }
  func.func @transform_5(%arg0: i32) -> (i32, i32) {
    %c0_i32 = arith.constant 0 : i32
    %c0_i32_0 = arith.constant 0 : i32
    %c0_i32_1 = arith.constant 0 : i32
    return %c0_i32, %c0_i32_0 : i32, i32
  }
  func.func @transform_6(%arg0: i32) -> (i32, i32, i32) {
    %c0_i32 = arith.constant 0 : i32
    %c0_i32_0 = arith.constant 0 : i32
    %c0_i32_1 = arith.constant 0 : i32
    return %arg0, %c0_i32, %c0_i32_0 : i32, i32, i32
  }
}

</mosaic_0001>

<llo_original>
// kernel: tpu_custom_call.1
$region0: #{tpu_custom_call.1}
  #allocation0 [shape = 'u32[]', space=smem, size = 0x4, offset = 0x4, fixed_abs, tag = 'smem constant byte address 0x4 - core index']
  #allocation1 [shape = 'u32[144,128]{1,0:T(1,128)}', space=vmem, size = 0x12000, scoped, tag = 'internal scratch']
  %s0 = inlined_call_operand.vmem [shape: f32[2,8,256], index: 0, kind: input, shape index: {}]
  %s1 = inlined_call_operand.vmem [shape: f32[8,1], index: 1, kind: input, shape index: {}]
  %s2 = inlined_call_operand.vmem [shape: f32[8,2], index: 2, kind: input, shape index: {}]
  %s3 = inlined_call_operand.vmem [shape: f32[1,2], index: 3, kind: input, shape index: {}]
  %s4 = inlined_call_operand.vmem [shape: f32[8,2], index: 4, kind: input, shape index: {}]
  %s5 = inlined_call_operand.vmem [shape: f32[8,1], index: 5, kind: input, shape index: {}]
  %s6 = inlined_call_operand.hbm [shape: f32[2,8,256], index: 6, kind: output, shape index: {}]
  %s7 = sld [smem:[#allocation0]]
  $region57: #{tpu_custom_call.1} parent=0
    _
  %s9 = ssub.s32 1, %s7
  %s10 = scalar_select 0, %s9, %s7
  $region1: #{tpu_custom_call.1} parent=0
    #allocation2 [shape = 'u8[16384]{0}', space=vmem, size = 0x4000, scoped, tag = 'output window, operand 0']
    #allocation3 [shape = 's32[2]{0}', space=sflag, size = 0x8, scoped, tag = 'scoped memory for tpu_custom_call.1']
    %11 = vsyncpa [#allocation3], 0
    %s12 = scalar_lea.sflag [#allocation3], 1
    %13 = vsyncpa %s12, 0
    loop: start=0, step=1, limit=4
    $region2: #{tpu_custom_call.1} parent=1 // loop_pre_header
      _
    $region3: #{tpu_custom_call.1} parent=1 // loop_header
      %s15 = sphi 0, %s19
      %p16 = scmp.ge.s32.totalorder %s15, 4
      %s25 = sphi 0, %s27
      %s28 = sphi 0, %s25
      %s29 = sphi 0, %s28
      %s45 = sphi 0, %s29
      %s49 = sphi 0, %s49
      %s51 = sphi 0, %s49
      %s52 = sphi 0, %s51
      %s66 = sphi 0, %s52
      %s70 = sphi 0, %s70
      %s72 = sphi 0, %s70
      %s73 = sphi 0, %s72
      %s87 = sphi 0, %s73
      %s91 = sphi 0, %s91
      %s93 = sphi 0, %s91
      %s94 = sphi 0, %s93
      %s108 = sphi 0, %s94
      %s112 = sphi 0, %s112
      %s114 = sphi 0, %s112
      %s115 = sphi 0, %s114
      %s129 = sphi 0, %s115
      %s133 = sphi 0, %s133
      %s135 = sphi 0, %s133
      %s136 = sphi 0, %s135
      %s150 = sphi 0, %s136
      %s156 = sphi 0, %s158
      %s159 = sphi 0, %s156
      %s160 = sphi 0, %s159
      %s176 = sphi 0, %s160
    $region4: #{tpu_custom_call.1} parent=1 // loop_header_branch
      %18 = sbr.rel (%p16) target = $region8
    $region5: #{tpu_custom_call.1} parent=1 // loop_body
      %s20 = ssub.s32 %s15, 1
      %s21 = ssub.s32 %s15, 2
      %s22 = sadd.s32 %s15, 1
      %s23 = ssub.s32 %s15, %s22
      %p24 = scmp.eq.s32.totalorder %s23, 0
      %s26 = sadd.s32 %s25, 1
      %s27 = scalar_select %p24, %s25, %s26
      %p30 = pneg %p24
      %p31 = scmp.eq.s32.totalorder %s15, 1
      %p32 = por %p30, %p31
      %p33 = scmp.ne.s32.totalorder %s25, %s28
      %p34 = scmp.eq.s32.totalorder %s15, 0
      %p35 = por %p33, %p34
      %p36 = scmp.ne.s32.totalorder %s25, %s28
      %p37 = scmp.eq.s32.totalorder %s20, 1
      %p38 = por %p36, %p37
      %p39 = scmp.ne.s32.totalorder %s28, %s29
      %p40 = scmp.eq.s32.totalorder %s20, 0
      %p41 = por %p39, %p40
      %p42 = scmp.ne.s32.totalorder %s28, %s29
      %p43 = scmp.eq.s32.totalorder %s21, 1
      %p44 = por %p42, %p43
      %p46 = scmp.ne.s32.totalorder %s29, %s45
      %p47 = scmp.eq.s32.totalorder %s21, 0
      %p48 = por %p46, %p47
      %s50 = sadd.s32 %s49, 1
      %p53 = scmp.eq.s32.totalorder %s15, 1
      %p54 = scmp.ne.s32.totalorder %s49, %s51
      %p55 = scmp.eq.s32.totalorder %s15, 0
      %p56 = por %p54, %p55
      %p57 = scmp.ne.s32.totalorder %s49, %s51
      %p58 = scmp.eq.s32.totalorder %s20, 1
      %p59 = por %p57, %p58
      %p60 = scmp.ne.s32.totalorder %s51, %s52
      %p61 = scmp.eq.s32.totalorder %s20, 0
      %p62 = por %p60, %p61
      %p63 = scmp.ne.s32.totalorder %s51, %s52
      %p64 = scmp.eq.s32.totalorder %s21, 1
      %p65 = por %p63, %p64
      %p67 = scmp.ne.s32.totalorder %s52, %s66
      %p68 = scmp.eq.s32.totalorder %s21, 0
      %p69 = por %p67, %p68
      %s71 = sadd.s32 %s70, 1
      %p74 = scmp.eq.s32.totalorder %s15, 1
      %p75 = scmp.ne.s32.totalorder %s70, %s72
      %p76 = scmp.eq.s32.totalorder %s15, 0
      %p77 = por %p75, %p76
      %p78 = scmp.ne.s32.totalorder %s70, %s72
      %p79 = scmp.eq.s32.totalorder %s20, 1
      %p80 = por %p78, %p79
      %p81 = scmp.ne.s32.totalorder %s72, %s73
      %p82 = scmp.eq.s32.totalorder %s20, 0
      %p83 = por %p81, %p82
      %p84 = scmp.ne.s32.totalorder %s72, %s73
      %p85 = scmp.eq.s32.totalorder %s21, 1
      %p86 = por %p84, %p85
      %p88 = scmp.ne.s32.totalorder %s73, %s87
      %p89 = scmp.eq.s32.totalorder %s21, 0
      %p90 = por %p88, %p89
      %s92 = sadd.s32 %s91, 1
      %p95 = scmp.eq.s32.totalorder %s15, 1
      %p96 = scmp.ne.s32.totalorder %s91, %s93
      %p97 = scmp.eq.s32.totalorder %s15, 0
      %p98 = por %p96, %p97
      %p99 = scmp.ne.s32.totalorder %s91, %s93
      %p100 = scmp.eq.s32.totalorder %s20, 1
      %p101 = por %p99, %p100
      %p102 = scmp.ne.s32.totalorder %s93, %s94
      %p103 = scmp.eq.s32.totalorder %s20, 0
      %p104 = por %p102, %p103
      %p105 = scmp.ne.s32.totalorder %s93, %s94
      %p106 = scmp.eq.s32.totalorder %s21, 1
      %p107 = por %p105, %p106
      %p109 = scmp.ne.s32.totalorder %s94, %s108
      %p110 = scmp.eq.s32.totalorder %s21, 0
      %p111 = por %p109, %p110
      %s113 = sadd.s32 %s112, 1
      %p116 = scmp.eq.s32.totalorder %s15, 1
      %p117 = scmp.ne.s32.totalorder %s112, %s114
      %p118 = scmp.eq.s32.totalorder %s15, 0
      %p119 = por %p117, %p118
      %p120 = scmp.ne.s32.totalorder %s112, %s114
      %p121 = scmp.eq.s32.totalorder %s20, 1
      %p122 = por %p120, %p121
      %p123 = scmp.ne.s32.totalorder %s114, %s115
      %p124 = scmp.eq.s32.totalorder %s20, 0
      %p125 = por %p123, %p124
      %p126 = scmp.ne.s32.totalorder %s114, %s115
      %p127 = scmp.eq.s32.totalorder %s21, 1
      %p128 = por %p126, %p127
      %p130 = scmp.ne.s32.totalorder %s115, %s129
      %p131 = scmp.eq.s32.totalorder %s21, 0
      %p132 = por %p130, %p131
      %s134 = sadd.s32 %s133, 1
      %p137 = scmp.eq.s32.totalorder %s15, 1
      %p138 = scmp.ne.s32.totalorder %s133, %s135
      %p139 = scmp.eq.s32.totalorder %s15, 0
      %p140 = por %p138, %p139
      %p141 = scmp.ne.s32.totalorder %s133, %s135
      %p142 = scmp.eq.s32.totalorder %s20, 1
      %p143 = por %p141, %p142
      %p144 = scmp.ne.s32.totalorder %s135, %s136
      %p145 = scmp.eq.s32.totalorder %s20, 0
      %p146 = por %p144, %p145
      %p147 = scmp.ne.s32.totalorder %s135, %s136
      %p148 = scmp.eq.s32.totalorder %s21, 1
      %p149 = por %p147, %p148
      %p151 = scmp.ne.s32.totalorder %s136, %s150
      %p152 = scmp.eq.s32.totalorder %s21, 0
      %p153 = por %p151, %p152
      %s154 = ssub.s32 %s15, %s22
      %p155 = scmp.eq.s32.totalorder %s154, 0
      %s157 = sadd.s32 %s156, 1
      %s158 = scalar_select %p155, %s156, %s157
      %p161 = pneg %p155
      %p162 = scmp.eq.s32.totalorder %s15, 1
      %p163 = por %p161, %p162
      %p164 = scmp.ne.s32.totalorder %s156, %s159
      %p165 = scmp.eq.s32.totalorder %s15, 0
      %p166 = por %p164, %p165
      %p167 = scmp.ne.s32.totalorder %s156, %s159
      %p168 = scmp.eq.s32.totalorder %s20, 1
      %p169 = por %p167, %p168
      %p170 = scmp.ne.s32.totalorder %s159, %s160
      %p171 = scmp.eq.s32.totalorder %s20, 0
      %p172 = por %p170, %p171
      %p173 = scmp.ne.s32.totalorder %s159, %s160
      %p174 = scmp.eq.s32.totalorder %s21, 1
      %p175 = por %p173, %p174
      %p177 = scmp.ne.s32.totalorder %s160, %s176
      %p178 = scmp.eq.s32.totalorder %s21, 0
      %p179 = por %p177, %p178
      %p180 = scmp.le.s32.totalorder 1, %s15
      %p181 = scmp.lt.s32.totalorder %s15, 3
      %p182 = pnand %p180, %p181
      %p183 = pneg %p182
      // Predicated region
      $region9: #{tpu_custom_call.1} parent=5 // pred_check
        _
      $region10: #{tpu_custom_call.1} parent=5 // pred_check_branch
        %185 = sbr.rel (%p182) target = $region12
      $region11: #{tpu_custom_call.1} parent=5 // pred_region
        %s186 = ssub.s32 %s15, 1
        // Predicated region
        $region13: #{tpu_custom_call.1} parent=11 // pred_check
          %p187 = pneg %p62
        $region14: #{tpu_custom_call.1} parent=11 // pred_check_branch
          %189 = sbr.rel (%p187) target = $region16
        $region15: #{tpu_custom_call.1} parent=11 // pred_region
          _
        $region16: #{tpu_custom_call.1} parent=11 // pred_fallthru
          _
        // Predicated region
        $region17: #{tpu_custom_call.1} parent=11 // pred_check
          %p190 = pneg %p83
        $region18: #{tpu_custom_call.1} parent=11 // pred_check_branch
          %192 = sbr.rel (%p190) target = $region20
        $region19: #{tpu_custom_call.1} parent=11 // pred_region
          _
        $region20: #{tpu_custom_call.1} parent=11 // pred_fallthru
          _
        // Predicated region
        $region21: #{tpu_custom_call.1} parent=11 // pred_check
          %p193 = pneg %p104
        $region22: #{tpu_custom_call.1} parent=11 // pred_check_branch
          %195 = sbr.rel (%p193) target = $region24
        $region23: #{tpu_custom_call.1} parent=11 // pred_region
          _
        $region24: #{tpu_custom_call.1} parent=11 // pred_fallthru
          _
        // Predicated region
        $region25: #{tpu_custom_call.1} parent=11 // pred_check
          %p196 = pneg %p125
        $region26: #{tpu_custom_call.1} parent=11 // pred_check_branch
          %198 = sbr.rel (%p196) target = $region28
        $region27: #{tpu_custom_call.1} parent=11 // pred_region
          _
        $region28: #{tpu_custom_call.1} parent=11 // pred_fallthru
          _
        // Predicated region
        $region29: #{tpu_custom_call.1} parent=11 // pred_check
          %p199 = pneg %p146
        $region30: #{tpu_custom_call.1} parent=11 // pred_check_branch
          %201 = sbr.rel (%p199) target = $region32
        $region31: #{tpu_custom_call.1} parent=11 // pred_region
          _
        $region32: #{tpu_custom_call.1} parent=11 // pred_fallthru
          _
      $region12: #{tpu_custom_call.1} parent=5 // pred_fallthru
        _
      %p202 = scmp.lt.s32.totalorder %s15, 2
      // Predicated region
      $region33: #{tpu_custom_call.1} parent=5 // pred_check
        %p203 = pneg %p202
      $region34: #{tpu_custom_call.1} parent=5 // pred_check_branch
        %205 = sbr.rel (%p203) target = $region36
      $region35: #{tpu_custom_call.1} parent=5 // pred_region
        // Predicated region
        $region37: #{tpu_custom_call.1} parent=35 // pred_check
          %p206 = pneg %p35
        $region38: #{tpu_custom_call.1} parent=35 // pred_check_branch
          %208 = sbr.rel (%p206) target = $region40
        $region39: #{tpu_custom_call.1} parent=35 // pred_region
          %p209 = scmp.lt.s32.totalorder %s15, 1
          %s210 = scalar_select %p209, %s15, 1
          %s211 = smul.addr %s210, 2
          %s212 = smul.addr %s211, 8
          %s213 = scalar_lea.vmem %s0, %s212
        $region40: #{tpu_custom_call.1} parent=35 // pred_fallthru
          _
      $region36: #{tpu_custom_call.1} parent=5 // pred_fallthru
        _
      %p214 = scmp.le.s32.totalorder 1, %s15
      %p215 = scmp.lt.s32.totalorder %s15, 3
      %p216 = pnand %p214, %p215
      %p217 = pneg %p216
      // Predicated region
      $region41: #{tpu_custom_call.1} parent=5 // pred_check
        _
      $region42: #{tpu_custom_call.1} parent=5 // pred_check_branch
        %219 = sbr.rel (%p216) target = $region44
      $region43: #{tpu_custom_call.1} parent=5 // pred_region
        %s220 = ssub.s32 %s15, 1
        %p221 = scmp.lt.s32.totalorder %s20, 1
        %s222 = scalar_select %p221, %s20, 1
        %s223 = smul.addr %s222, 2
        %s224 = smul.addr %s223, 8
        %s225 = scalar_lea.vmem %s0, %s224
        %p226 = pneg %p41
        %p227 = pneg %p38
        %p228 = pneg %p62
        %p229 = pneg %p59
        %p230 = pneg %p83
        %p231 = pneg %p80
        %p232 = pneg %p104
        %p233 = pneg %p101
        %p234 = pneg %p125
        %p235 = pneg %p122
        %p236 = pneg %p146
        %p237 = pneg %p143
        %p238 = pneg %p172
        %p239 = pneg %p169
        %s240 = sand.u32 %s159, 1
        %s241 = scalar_lea.sflag [#allocation3], %s240
        %s242 = sand.u32 %s159, 1
        %s243 = smul.addr %s242, 16
        %s244 = scalar_lea.vmem [#allocation2], %s243
        %p245 = scmp.lt.s32.totalorder %s20, 1
        %s246 = scalar_select %p245, %s20, 1
        %s247 = smul.addr %s246, 2
        %s248 = smul.addr %s247, 8
        %s249 = scalar_lea.vmem %s0, %s248
        %v250 = vld [vmem:[%s249] sm:$0xff]
        %v251 = vld [vmem:[%s249 + $0x8] sm:$0xff]
        %v252 = vadd.f32 %v250, %v251
        %253 = vadd.xlane.f32.xlu0 %v252
        %v254 = vpop.xlane.xlu0 %253
        %v255 = vrcp.pop 256.0
        %v256 = vmul.f32 %v254, %v255
        %v257 = vld [vmem:[%s2] sm:$0xff]
        %v258 = vmul.f32 %v257, %v256
        %vm259 = vcmask 15360
        %v260 = vsel %vm259, %v258, 0.0
        %v261 = vrot.slane %v260, 4
        %v262 = vadd.f32 %v260, %v261
        %v263 = vrot.slane %v262, 2
        %v264 = vadd.f32 %v262, %v263
        %v265 = vrot.slane %v264, 1
        %v266 = vadd.f32 %v264, %v265
        %v267 = vld [vmem:[%s3] sm:$0x1]
        %v268 = vadd.f32 %v266, %v267
        %v269 = vmax.f32 %v268, 0.0
        %v270 = vld [vmem:[%s4] sm:$0xff]
        %v271 = vlaneseq
        %v272 = vshrl.u32 %v271, 7
        %v273 = vsub.s32 0, %v272
        %v274 = vrot.slane %v269, %v273
        %v275 = vmul.f32 %v270, %v274
        %v276 = vsel %vm259, %v275, 0.0
        %277 = vadd.xlane.f32.xlu0 %v276
        %v278 = vpop.xlane.xlu0 %277
        %v279 = vld [vmem:[%s5] sm:$0xff]
        %v280 = vadd.f32 %v278, %v279
        %v281 = vxor.u32 %v280, 2147483648
        %v282 = vmul.f32 %v281, 1.442695
        %v283 = vpow.pop %v282
        %v284 = vadd.f32 %v283, 1.0
        %v285 = vrcp.pop %v284
        %v286 = vmul.f32 1.0, %v285
        %v287 = vld [vmem:[%s1] sm:$0xff]
        %289 = vset.pattern.permute.xlu0 0
        %290 = vperm.xlu0 %289, %v287
        %v291 = vpop.permute.xlu0 %290
        %v293 = vmul.f32 %v250, %v291
        %v294 = vmul.f32 %v251, %v291
        %v295 = vrot.slane %v293, 4
        %v296 = vadd.f32 %v293, %v295
        %v297 = vrot.slane %v296, 2
        %v298 = vadd.f32 %v296, %v297
        %v299 = vrot.slane %v298, 1
        %v300 = vadd.f32 %v298, %v299
        %v301 = vrot.slane %v294, 4
        %v302 = vadd.f32 %v294, %v301
        %v303 = vrot.slane %v302, 2
        %v304 = vadd.f32 %v302, %v303
        %v305 = vrot.slane %v304, 1
        %v306 = vadd.f32 %v304, %v305
        %v307 = vxor.u32 %v300, 2147483648
        %v308 = vxor.u32 %v306, 2147483648
        %v309 = vmul.f32 %v307, 1.442695
        %v310 = vpow.pop %v309
        %v311 = vmul.f32 %v308, 1.442695
        %v312 = vpow.pop %v311
        %v313 = vadd.f32 %v310, 1.0
        %v314 = vadd.f32 %v312, 1.0
        %v315 = vrcp.pop %v313
        %v316 = vmul.f32 1.0, %v315
        %v317 = vrcp.pop %v314
        %v318 = vmul.f32 1.0, %v317
        %320 = vset.pattern.permute.xlu0 0
        %321 = vperm.xlu0 %320, %v286
        %v322 = vpop.permute.xlu0 %321
        %v324 = vadd.f32 %v316, %v322
        %v325 = vadd.f32 %v318, %v322
        %v326 = vmul.f32 %v250, %v324
        %v327 = vmul.f32 %v251, %v325
        %328 = vst [vmem:[%s244] sm:$0xff] %v326
        %329 = vst [vmem:[%s244 + $0x8] sm:$0xff] %v327
        %s330 = sand.u32 %s159, 1
        %s331 = scalar_lea.sflag [#allocation3], %s330
        %s332 = sand.u32 %s159, 1
        %s333 = smul.addr %s332, 16
        %s334 = scalar_lea.vmem [#allocation2], %s333
        // Predicated region
        $region45: #{tpu_custom_call.1} parent=43 // pred_check
          %p335 = pneg %p169
        $region46: #{tpu_custom_call.1} parent=43 // pred_check_branch
          %337 = sbr.rel (%p335) target = $region48
        $region47: #{tpu_custom_call.1} parent=43 // pred_region
          %s339 = ssub.s32 256, 256
          %340 = vsyncadd %s331, %s339
          %s341 = smul.addr %s20, 2
          %s342 = smul.addr %s341, 128
          %s343 = scalar_lea.hbm %s6, %s342
          %s345 = sshll.u32 %s334, 4
          %s346 = int_to_ptr.vmem [resolvable:$true] %s345
          %348 = dma.vmem_to_hbm [thread:$0]  %s346, 256, %s343, %s331
        $region48: #{tpu_custom_call.1} parent=43 // pred_fallthru
          _
      $region44: #{tpu_custom_call.1} parent=5 // pred_fallthru
        _
      %p349 = scmp.le.s32.totalorder 2, %s15
      // Predicated region
      $region49: #{tpu_custom_call.1} parent=5 // pred_check
        %p350 = pneg %p349
      $region50: #{tpu_custom_call.1} parent=5 // pred_check_branch
        %352 = sbr.rel (%p350) target = $region52
      $region51: #{tpu_custom_call.1} parent=5 // pred_region
        %s353 = ssub.s32 %s15, 2
        // Predicated region
        $region53: #{tpu_custom_call.1} parent=51 // pred_check
          %p354 = pneg %p175
        $region54: #{tpu_custom_call.1} parent=51 // pred_check_branch
          %356 = sbr.rel (%p354) target = $region56
        $region55: #{tpu_custom_call.1} parent=51 // pred_region
          %s357 = sand.u32 %s160, 1
          %s358 = scalar_lea.sflag [#allocation3], %s357
          %s359 = sand.u32 %s160, 1
          %s360 = smul.addr %s359, 16
          %s361 = scalar_lea.vmem [#allocation2], %s360
          %362 = dma.done %s358, 256
        $region56: #{tpu_custom_call.1} parent=51 // pred_fallthru
          _
      $region52: #{tpu_custom_call.1} parent=5 // pred_fallthru
        _
    $region6: #{tpu_custom_call.1} parent=1 // loop_footer
      %s19 = sadd.s32 1, %s15
    $region7: #{tpu_custom_call.1} parent=1 // loop_footer_branch
      %14 = sbr.rel target = $region3
    $region8: #{tpu_custom_call.1} parent=1 // loop_exit
      _
    %363 = vsyncpa [#allocation3], 1
    %s364 = scalar_lea.sflag [#allocation3], 1
    %365 = vsyncpa %s364, 1

</llo_original>
